<compile_context>
chip_gen: v7x
topology: tpu7x:2x2x1
jax: 0.10.0
libtpu: 0.0.40
codegen_flags: <defaults>
</compile_context>

<pallas_src>
import functools

import jax
import jax.numpy as jnp
from jax.experimental import pallas as pl
from jax.experimental.pallas import tpu as pltpu

HIDDEN = 64
OUT_PAD = 8          # pad the 2 output rows (mean, std) to a full sublane tile
TB = 512             # batch-lane tile per grid step (multiple of 256 for MXU width)


def _mlp_kernel(x_ref, w1_ref, b1_ref, w2_ref, b2_ref, w3_ref, b3_ref, out_ref):
    x = x_ref[...]                                            # (1, TB)

    # Layer 1: Linear(1, 64) + ReLU as an outer-product broadcast on the VPU.
    h1 = jnp.maximum(w1_ref[...] * x + b1_ref[...], 0.0)      # (64, TB)

    # Layer 2: Linear(64, 64) + ReLU on the MXU (lane-dense 64 x TB result).
    h2 = jnp.dot(w2_ref[...], h1, preferred_element_type=jnp.float32)
    h2 = jnp.maximum(h2 + b2_ref[...], 0.0)                   # (64, TB)

    # Layer 3: Linear(64, 2) with rows padded to 8 (zeros are inert).
    out = jnp.dot(w3_ref[...], h2, preferred_element_type=jnp.float32)
    out_ref[...] = out + b3_ref[...]                          # (8, TB), rows 0/1 valid


def uncertainty_model_forward(x, params):
    """x: (N, 1) float32.  Returns (mean, std), each (N, 1) float32."""
    w1, b1, w2, b2, w3p, b3p = params
    n = x.shape[0]
    n_pad = max(TB, ((n + TB - 1) // TB) * TB)

    # Batch on the lane axis; zero-pad the tail (padded lanes are discarded).
    x_t = jnp.zeros((1, n_pad), jnp.float32).at[0, :n].set(x[:, 0])

    const = lambda i: (0, 0)   # weights: same block every grid step (stay resident)

    out = pl.pallas_call(
        _mlp_kernel,
        out_shape=jax.ShapeDtypeStruct((OUT_PAD, n_pad), jnp.float32),
        grid=(n_pad // TB,),
        in_specs=[
            pl.BlockSpec((1, TB), lambda i: (0, i)),          # x block (pipelined)
            pl.BlockSpec((HIDDEN, 1), const),                 # w1
            pl.BlockSpec((HIDDEN, 1), const),                 # b1
            pl.BlockSpec((HIDDEN, HIDDEN), const),            # w2
            pl.BlockSpec((HIDDEN, 1), const),                 # b2
            pl.BlockSpec((OUT_PAD, HIDDEN), const),           # w3 (padded rows)
            pl.BlockSpec((OUT_PAD, 1), const),                # b3 (padded rows)
        ],
        out_specs=pl.BlockSpec((OUT_PAD, TB), lambda i: (0, i)),
        compiler_params=pltpu.CompilerParams(
            dimension_semantics=("parallel",),                # shards grid on v7x's 2 TCs
        ),
    )(x_t, w1, b1, w2, b2, w3p, b3p)

    mean = out[0, :n].reshape(n, 1)
    std = jnp.maximum(out[1, :n], 1e-5).reshape(n, 1)         # clamp(min=1e-5)
    return mean, std


def init_params(key):
    """Deterministic init matching the torch module's parameter shapes.

    Weights are stored in torch (out_features, in_features) layout since the
    kernel computes W @ x_T (batch on lanes).  Uniform(-1/sqrt(in), 1/sqrt(in)),
    same bounds as torch's default Linear init.  The final layer is zero-padded
    to 8 output rows ONCE here (not per forward call).
    """
    keys = jax.random.split(key, 6)

    def linear(kw, kb, fan_in, fan_out):
        bound = 1.0 / jnp.sqrt(float(fan_in))
        w = jax.random.uniform(kw, (fan_out, fan_in), jnp.float32, -bound, bound)
        b = jax.random.uniform(kb, (fan_out, 1), jnp.float32, -bound, bound)
        return w, b

    w1, b1 = linear(keys[0], keys[1], 1, HIDDEN)              # (64, 1), (64, 1)
    w2, b2 = linear(keys[2], keys[3], HIDDEN, HIDDEN)         # (64, 64), (64, 1)
    w3, b3 = linear(keys[4], keys[5], HIDDEN, 2)              # (2, 64), (2, 1)

    w3p = jnp.zeros((OUT_PAD, HIDDEN), jnp.float32).at[:2, :].set(w3)
    b3p = jnp.zeros((OUT_PAD, 1), jnp.float32).at[:2, :].set(b3)
    return (w1, b1, w2, b2, w3p, b3p)


def reference_forward(x, params):
    w1, b1, w2, b2, w3p, b3p = params
    h1 = jnp.maximum(x @ w1.T + b1.T, 0.0)
    h2 = jnp.maximum(h1 @ w2.T + b2.T, 0.0)
    out = h2 @ w3p.T + b3p.T
    mean = out[:, 0:1]
    std = jnp.maximum(out[:, 1:2], 1e-5)
    return mean, std


if __name__ == "__main__":
    key = jax.random.PRNGKey(0)
    k_param, k_x = jax.random.split(key)

    params = init_params(k_param)
    x = jax.random.normal(k_x, (8, 1), jnp.float32)  # batch=8, feature=1

    fwd = jax.jit(functools.partial(uncertainty_model_forward, params=params))
    mean, std = fwd(x)
    jax.block_until_ready((mean, std))

    ref_mean, ref_std = reference_forward(x, params)
    assert mean.shape == (8, 1) and std.shape == (8, 1)
    assert jnp.allclose(mean, ref_mean, atol=1e-5, rtol=1e-5)
    assert jnp.allclose(std, ref_std, atol=1e-5, rtol=1e-5)
    assert bool(jnp.all(std >= 1e-5))

    # TODO(synk): torch.distributions.Normal has no Pallas/JAX-array
    # equivalent; we return its parameters (mean, std) instead.
    print("KERNEL_OK")
</pallas_src>

<mosaic_0001>
module attributes {stable_mosaic.version = 11 : i64} {
  func.func @_mlp_kernel(%arg0: i32, %arg1: memref<1x512xf32, #tpu.memory_space<vmem>>, %arg2: memref<64x1xf32, #tpu.memory_space<vmem>>, %arg3: memref<64x1xf32, #tpu.memory_space<vmem>>, %arg4: memref<64x64xf32, #tpu.memory_space<vmem>>, %arg5: memref<64x1xf32, #tpu.memory_space<vmem>>, %arg6: memref<8x64xf32, #tpu.memory_space<vmem>>, %arg7: memref<8x1xf32, #tpu.memory_space<vmem>>, %arg8: memref<8x512xf32, #tpu.memory_space<vmem>>) attributes {dimension_semantics = [#tpu.dimension_semantics<parallel>], iteration_bounds = array<i64: 1>, scalar_prefetch = 0 : i64, scratch_operands = 0 : i64, tpu.core_type = #tpu.core_type<tc>, window_params = [{transform_indices = @transform_0, window_bounds = array<i64: 1, 512>}, {pipeline_mode = #tpu.pipeline_mode<synchronous>, transform_indices = @transform_1, window_bounds = array<i64: 64, 1>}, {pipeline_mode = #tpu.pipeline_mode<synchronous>, transform_indices = @transform_2, window_bounds = array<i64: 64, 1>}, {pipeline_mode = #tpu.pipeline_mode<synchronous>, transform_indices = @transform_3, window_bounds = array<i64: 64, 64>}, {pipeline_mode = #tpu.pipeline_mode<synchronous>, transform_indices = @transform_4, window_bounds = array<i64: 64, 1>}, {pipeline_mode = #tpu.pipeline_mode<synchronous>, transform_indices = @transform_5, window_bounds = array<i64: 8, 64>}, {pipeline_mode = #tpu.pipeline_mode<synchronous>, transform_indices = @transform_6, window_bounds = array<i64: 8, 1>}, {transform_indices = @transform_7, window_bounds = array<i64: 8, 512>}]} {
    %c0 = arith.constant 0 : index
    %c0_0 = arith.constant 0 : index
    %0 = vector.load %arg1[%c0, %c0_0] : memref<1x512xf32, #tpu.memory_space<vmem>>, vector<1x512xf32>
    %c0_1 = arith.constant 0 : index
    %c0_2 = arith.constant 0 : index
    %1 = vector.load %arg2[%c0_1, %c0_2] : memref<64x1xf32, #tpu.memory_space<vmem>>, vector<64x1xf32>
    %2 = vector.broadcast %1 : vector<64x1xf32> to vector<64x512xf32>
    %3 = vector.broadcast %0 : vector<1x512xf32> to vector<64x512xf32>
    %4 = arith.mulf %2, %3 : vector<64x512xf32>
    %c0_3 = arith.constant 0 : index
    %c0_4 = arith.constant 0 : index
    %5 = vector.load %arg3[%c0_3, %c0_4] : memref<64x1xf32, #tpu.memory_space<vmem>>, vector<64x1xf32>
    %6 = vector.broadcast %5 : vector<64x1xf32> to vector<64x512xf32>
    %7 = arith.addf %4, %6 : vector<64x512xf32>
    %cst = arith.constant 0.000000e+00 : f32
    %8 = vector.broadcast %cst : f32 to vector<64x512xf32>
    %9 = arith.maximumf %7, %8 : vector<64x512xf32>
    %c0_5 = arith.constant 0 : index
    %c0_6 = arith.constant 0 : index
    %10 = vector.load %arg4[%c0_5, %c0_6] : memref<64x64xf32, #tpu.memory_space<vmem>>, vector<64x64xf32>
    %cst_7 = arith.constant dense<0.000000e+00> : vector<64x512xf32>
    %11 = tpu.matmul %10, %9, %cst_7 {dimension_numbers = #tpu.dot_dimension_numbers<[1], [0], [0], [1], [0, 0, 1, 1], [], []>} : vector<64x64xf32>, vector<64x512xf32>, vector<64x512xf32> -> vector<64x512xf32>
    %c0_8 = arith.constant 0 : index
    %c0_9 = arith.constant 0 : index
    %12 = vector.load %arg5[%c0_8, %c0_9] : memref<64x1xf32, #tpu.memory_space<vmem>>, vector<64x1xf32>
    %13 = vector.broadcast %12 : vector<64x1xf32> to vector<64x512xf32>
    %14 = arith.addf %11, %13 : vector<64x512xf32>
    %cst_10 = arith.constant 0.000000e+00 : f32
    %15 = vector.broadcast %cst_10 : f32 to vector<64x512xf32>
    %16 = arith.maximumf %14, %15 : vector<64x512xf32>
    %c0_11 = arith.constant 0 : index
    %c0_12 = arith.constant 0 : index
    %17 = vector.load %arg6[%c0_11, %c0_12] : memref<8x64xf32, #tpu.memory_space<vmem>>, vector<8x64xf32>
    %cst_13 = arith.constant dense<0.000000e+00> : vector<8x512xf32>
    %18 = tpu.matmul %17, %16, %cst_13 {dimension_numbers = #tpu.dot_dimension_numbers<[1], [0], [0], [1], [0, 0, 1, 1], [], []>} : vector<8x64xf32>, vector<64x512xf32>, vector<8x512xf32> -> vector<8x512xf32>
    %c0_14 = arith.constant 0 : index
    %c0_15 = arith.constant 0 : index
    %19 = vector.load %arg7[%c0_14, %c0_15] : memref<8x1xf32, #tpu.memory_space<vmem>>, vector<8x1xf32>
    %20 = vector.broadcast %19 : vector<8x1xf32> to vector<8x512xf32>
    %21 = arith.addf %18, %20 : vector<8x512xf32>
    %c0_16 = arith.constant 0 : index
    %c0_17 = arith.constant 0 : index
    %22 = vector.load %arg8[%c0_16, %c0_17] : memref<8x512xf32, #tpu.memory_space<vmem>>, vector<8x512xf32>
    tpu.vector_store %arg8[%c0_16, %c0_17], %21 {strides = array<i32>} : memref<8x512xf32, #tpu.memory_space<vmem>>, vector<8x512xf32>,
    return
  }
  func.func @transform_0(%arg0: i32) -> (i32, i32) {
    %c0_i32 = arith.constant 0 : i32
    %c0_i32_0 = arith.constant 0 : i32
    return %c0_i32, %arg0 : i32, i32
  }
  func.func @transform_1(%arg0: i32) -> (i32, i32) {
    %c0_i32 = arith.constant 0 : i32
    %c0_i32_0 = arith.constant 0 : i32
    %c0_i32_1 = arith.constant 0 : i32
    return %c0_i32, %c0_i32_0 : i32, i32
  }
  func.func @transform_2(%arg0: i32) -> (i32, i32) {
    %c0_i32 = arith.constant 0 : i32
    %c0_i32_0 = arith.constant 0 : i32
    %c0_i32_1 = arith.constant 0 : i32
    return %c0_i32, %c0_i32_0 : i32, i32
  }
  func.func @transform_3(%arg0: i32) -> (i32, i32) {
    %c0_i32 = arith.constant 0 : i32
    %c0_i32_0 = arith.constant 0 : i32
    %c0_i32_1 = arith.constant 0 : i32
    return %c0_i32, %c0_i32_0 : i32, i32
  }
  func.func @transform_4(%arg0: i32) -> (i32, i32) {
    %c0_i32 = arith.constant 0 : i32
    %c0_i32_0 = arith.constant 0 : i32
    %c0_i32_1 = arith.constant 0 : i32
    return %c0_i32, %c0_i32_0 : i32, i32
  }
  func.func @transform_5(%arg0: i32) -> (i32, i32) {
    %c0_i32 = arith.constant 0 : i32
    %c0_i32_0 = arith.constant 0 : i32
    %c0_i32_1 = arith.constant 0 : i32
    return %c0_i32, %c0_i32_0 : i32, i32
  }
  func.func @transform_6(%arg0: i32) -> (i32, i32) {
    %c0_i32 = arith.constant 0 : i32
    %c0_i32_0 = arith.constant 0 : i32
    %c0_i32_1 = arith.constant 0 : i32
    return %c0_i32, %c0_i32_0 : i32, i32
  }
  func.func @transform_7(%arg0: i32) -> (i32, i32) {
    %c0_i32 = arith.constant 0 : i32
    %c0_i32_0 = arith.constant 0 : i32
    return %c0_i32, %arg0 : i32, i32
  }
}

</mosaic_0001>

<llo_original>
// kernel: uncertainty_model_forward.1
$region0: #{uncertainty_model_forward.1}
  #allocation0 [shape = 'u32[]', space=smem, size = 0x4, offset = 0x4, fixed_abs, tag = 'smem constant byte address 0x4 - core index']
  #allocation1 [shape = 'u32[144,128]{1,0:T(1,128)}', space=vmem, size = 0x12000, scoped, tag = 'internal scratch']
  %s0 = inlined_call_operand.vmem [shape: f32[1,512], index: 0, kind: input, shape index: {}]
  %s1 = inlined_call_operand.hbm [shape: f32[64,1], index: 1, kind: input, shape index: {}]
  %s2 = inlined_call_operand.hbm [shape: f32[64,1], index: 2, kind: input, shape index: {}]
  %s3 = inlined_call_operand.hbm [shape: f32[64,64], index: 3, kind: input, shape index: {}]
  %s4 = inlined_call_operand.hbm [shape: f32[64,1], index: 4, kind: input, shape index: {}]
  %s5 = inlined_call_operand.vmem [shape: f32[8,64], index: 5, kind: input, shape index: {}]
  %s6 = inlined_call_operand.vmem [shape: f32[8,1], index: 6, kind: input, shape index: {}]
  %s7 = inlined_call_operand.vmem [shape: f32[8,512], index: 7, kind: output, shape index: {}]
  %s8 = sld [smem:[#allocation0]]
  $region54: #{uncertainty_model_forward.1} parent=0
    _
  %s10 = ssub.s32 1, %s8
  %s11 = scalar_select 0, %s10, %s8
  $region1: #{uncertainty_model_forward.1} parent=0
    #allocation2 [shape = 'u8[32768]{0}', space=vmem, size = 0x8000, scoped, tag = 'input window, operand 1, single buffered']
    #allocation3 [shape = 's32[1]{0}', space=sflag, size = 0x4, scoped, tag = 'scoped memory for uncertainty_model_forward.1']
    #allocation4 [shape = 'u8[32768]{0}', space=vmem, size = 0x8000, scoped, tag = 'input window, operand 2, single buffered']
    #allocation5 [shape = 's32[1]{0}', space=sflag, size = 0x4, scoped, tag = 'scoped memory for uncertainty_model_forward.1']
    #allocation6 [shape = 'u8[32768]{0}', space=vmem, size = 0x8000, scoped, tag = 'input window, operand 3, single buffered']
    #allocation7 [shape = 'u8[32768]{0}', space=vmem, size = 0x8000, scoped, tag = 'input window, operand 4, single buffered']
    #allocation8 [shape = 's32[1]{0}', space=sflag, size = 0x4, scoped, tag = 'scoped memory for uncertainty_model_forward.1']
    %12 = vsyncpa [#allocation3], 0
    %13 = vsyncpa [#allocation5], 0
    %14 = vsyncpa [#allocation8], 0
    // Predicated region
    $region2: #{uncertainty_model_forward.1} parent=1 // pred_check
      _
    $region3: #{uncertainty_model_forward.1} parent=1 // pred_check_branch
      %16 = sbr.rel (0) target = $region5
    $region4: #{uncertainty_model_forward.1} parent=1 // pred_region
      _
    $region5: #{uncertainty_model_forward.1} parent=1 // pred_fallthru
      _
    // Predicated region
    $region6: #{uncertainty_model_forward.1} parent=1 // pred_check
      _
    $region7: #{uncertainty_model_forward.1} parent=1 // pred_check_branch
      %18 = sbr.rel (0) target = $region9
    $region8: #{uncertainty_model_forward.1} parent=1 // pred_region
      %s20 = ssub.s32 1024, 1024
      %21 = vsyncadd [#allocation3], %s20
      %s22 = sshll.u32 [#allocation2], 4
      %s23 = int_to_ptr.vmem [resolvable:$true] %s22
      %28 = dma.hbm_to_vmem [thread:$0]  %s1, 1024, %s23, [#allocation3], 128, 128, 8
    $region9: #{uncertainty_model_forward.1} parent=1 // pred_fallthru
      _
    // Predicated region
    $region10: #{uncertainty_model_forward.1} parent=1 // pred_check
      _
    $region11: #{uncertainty_model_forward.1} parent=1 // pred_check_branch
      %30 = sbr.rel (0) target = $region13
    $region12: #{uncertainty_model_forward.1} parent=1 // pred_region
      %s32 = ssub.s32 1024, 1024
      %33 = vsyncadd [#allocation5], %s32
      %s34 = sshll.u32 [#allocation4], 4
      %s35 = int_to_ptr.vmem [resolvable:$true] %s34
      %40 = dma.hbm_to_vmem [thread:$0]  %s2, 1024, %s35, [#allocation5], 128, 128, 8
    $region13: #{uncertainty_model_forward.1} parent=1 // pred_fallthru
      _
    // Predicated region
    $region14: #{uncertainty_model_forward.1} parent=1 // pred_check
      _
    $region15: #{uncertainty_model_forward.1} parent=1 // pred_check_branch
      %42 = sbr.rel (0) target = $region17
    $region16: #{uncertainty_model_forward.1} parent=1 // pred_region
      %s44 = ssub.s32 1024, 1024
      %45 = vsyncadd [#allocation5], %s44
      %s46 = sshll.u32 [#allocation6], 4
      %s47 = int_to_ptr.vmem [resolvable:$true] %s46
      %52 = dma.hbm_to_vmem [thread:$0]  %s3, 1024, %s47, [#allocation5], 128, 128, 8
    $region17: #{uncertainty_model_forward.1} parent=1 // pred_fallthru
      _
    // Predicated region
    $region18: #{uncertainty_model_forward.1} parent=1 // pred_check
      _
    $region19: #{uncertainty_model_forward.1} parent=1 // pred_check_branch
      %54 = sbr.rel (0) target = $region21
    $region20: #{uncertainty_model_forward.1} parent=1 // pred_region
      %s56 = ssub.s32 1024, 1024
      %57 = vsyncadd [#allocation8], %s56
      %s58 = sshll.u32 [#allocation7], 4
      %s59 = int_to_ptr.vmem [resolvable:$true] %s58
      %64 = dma.hbm_to_vmem [thread:$0]  %s4, 1024, %s59, [#allocation8], 128, 128, 8
    $region21: #{uncertainty_model_forward.1} parent=1 // pred_fallthru
      _
    // Predicated region
    $region22: #{uncertainty_model_forward.1} parent=1 // pred_check
      _
    $region23: #{uncertainty_model_forward.1} parent=1 // pred_check_branch
      %66 = sbr.rel (0) target = $region25
    $region24: #{uncertainty_model_forward.1} parent=1 // pred_region
      _
    $region25: #{uncertainty_model_forward.1} parent=1 // pred_fallthru
      _
    // Predicated region
    $region26: #{uncertainty_model_forward.1} parent=1 // pred_check
      _
    $region27: #{uncertainty_model_forward.1} parent=1 // pred_check_branch
      %68 = sbr.rel (0) target = $region29
    $region28: #{uncertainty_model_forward.1} parent=1 // pred_region
      _
    $region29: #{uncertainty_model_forward.1} parent=1 // pred_fallthru
      _
    // Predicated region
    $region30: #{uncertainty_model_forward.1} parent=1 // pred_check
      _
    $region31: #{uncertainty_model_forward.1} parent=1 // pred_check_branch
      %70 = sbr.rel (0) target = $region33
    $region32: #{uncertainty_model_forward.1} parent=1 // pred_region
      %71 = dma.done [#allocation3], 1024
    $region33: #{uncertainty_model_forward.1} parent=1 // pred_fallthru
      _
    // Predicated region
    $region34: #{uncertainty_model_forward.1} parent=1 // pred_check
      _
    $region35: #{uncertainty_model_forward.1} parent=1 // pred_check_branch
      %73 = sbr.rel (0) target = $region37
    $region36: #{uncertainty_model_forward.1} parent=1 // pred_region
      %74 = dma.done [#allocation5], 1024
    $region37: #{uncertainty_model_forward.1} parent=1 // pred_fallthru
      _
    // Predicated region
    $region38: #{uncertainty_model_forward.1} parent=1 // pred_check
      _
    $region39: #{uncertainty_model_forward.1} parent=1 // pred_check_branch
      %76 = sbr.rel (0) target = $region41
    $region40: #{uncertainty_model_forward.1} parent=1 // pred_region
      %77 = dma.done [#allocation5], 1024
    $region41: #{uncertainty_model_forward.1} parent=1 // pred_fallthru
      _
    // Predicated region
    $region42: #{uncertainty_model_forward.1} parent=1 // pred_check
      _
    $region43: #{uncertainty_model_forward.1} parent=1 // pred_check_branch
      %79 = sbr.rel (0) target = $region45
    $region44: #{uncertainty_model_forward.1} parent=1 // pred_region
      %80 = dma.done [#allocation8], 1024
    $region45: #{uncertainty_model_forward.1} parent=1 // pred_fallthru
      _
    %v81 = vld [vmem:[%s0] sm:$0xf]
    %v82 = vld [vmem:[#allocation2] sm:$0xff]
    %v83 = vld [vmem:[#allocation2 + $0x8] sm:$0xff]
    %v84 = vld [vmem:[#allocation2 + $0x10] sm:$0xff]
    %v85 = vld [vmem:[#allocation2 + $0x18] sm:$0xff]
    %v86 = vld [vmem:[#allocation2 + $0x20] sm:$0xff]
    %v87 = vld [vmem:[#allocation2 + $0x28] sm:$0xff]
    %v88 = vld [vmem:[#allocation2 + $0x30] sm:$0xff]
    %v89 = vld [vmem:[#allocation2 + $0x38] sm:$0xff]
    %91 = vset.pattern.permute.xlu0 0
    %92 = vperm.xlu0 %91, %v82
    %v93 = vpop.permute.xlu0 %92
    %96 = vset.pattern.permute.xlu0 0
    %97 = vperm.xlu0 %96, %v83
    %v98 = vpop.permute.xlu0 %97
    %101 = vset.pattern.permute.xlu0 0
    %102 = vperm.xlu0 %101, %v84
    %v103 = vpop.permute.xlu0 %102
    %106 = vset.pattern.permute.xlu0 0
    %107 = vperm.xlu0 %106, %v85
    %v108 = vpop.permute.xlu0 %107
    %111 = vset.pattern.permute.xlu0 0
    %112 = vperm.xlu0 %111, %v86
    %v113 = vpop.permute.xlu0 %112
    %116 = vset.pattern.permute.xlu0 0
    %117 = vperm.xlu0 %116, %v87
    %v118 = vpop.permute.xlu0 %117
    %121 = vset.pattern.permute.xlu0 0
    %122 = vperm.xlu0 %121, %v88
    %v123 = vpop.permute.xlu0 %122
    %126 = vset.pattern.permute.xlu0 0
    %127 = vperm.xlu0 %126, %v89
    %v128 = vpop.permute.xlu0 %127
    %v131 = vlaneseq
    %v132 = vshrl.u32 %v131, 7
    %v133 = vsub.s32 0, %v132
    %v134 = vrot.slane %v81, %v133
    %v135 = vlaneseq
    %v136 = vshrl.u32 %v135, 7
    %v137 = vsub.s32 1, %v136
    %v138 = vrot.slane %v81, %v137
    %v139 = vlaneseq
    %v140 = vshrl.u32 %v139, 7
    %v141 = vsub.s32 2, %v140
    %v142 = vrot.slane %v81, %v141
    %v143 = vlaneseq
    %v144 = vshrl.u32 %v143, 7
    %v145 = vsub.s32 3, %v144
    %v146 = vrot.slane %v81, %v145
    %v151 = vmul.f32 %v93, %v134
    %v152 = vmul.f32 %v93, %v138
    %v153 = vmul.f32 %v93, %v142
    %v154 = vmul.f32 %v93, %v146
    %v155 = vmul.f32 %v98, %v134
    %v156 = vmul.f32 %v98, %v138
    %v157 = vmul.f32 %v98, %v142
    %v158 = vmul.f32 %v98, %v146
    %v159 = vmul.f32 %v103, %v134
    %v160 = vmul.f32 %v103, %v138
    %v161 = vmul.f32 %v103, %v142
    %v162 = vmul.f32 %v103, %v146
    %v163 = vmul.f32 %v108, %v134
    %v164 = vmul.f32 %v108, %v138
    %v165 = vmul.f32 %v108, %v142
    %v166 = vmul.f32 %v108, %v146
    %v167 = vmul.f32 %v113, %v134
    %v168 = vmul.f32 %v113, %v138
    %v169 = vmul.f32 %v113, %v142
    %v170 = vmul.f32 %v113, %v146
    %v171 = vmul.f32 %v118, %v134
    %v172 = vmul.f32 %v118, %v138
    %v173 = vmul.f32 %v118, %v142
    %v174 = vmul.f32 %v118, %v146
    %v175 = vmul.f32 %v123, %v134
    %v176 = vmul.f32 %v123, %v138
    %v177 = vmul.f32 %v123, %v142
    %v178 = vmul.f32 %v123, %v146
    %v179 = vmul.f32 %v128, %v134
    %v180 = vmul.f32 %v128, %v138
    %v181 = vmul.f32 %v128, %v142
    %v182 = vmul.f32 %v128, %v146
    %v183 = vld [vmem:[#allocation4] sm:$0xff]
    %v184 = vld [vmem:[#allocation4 + $0x8] sm:$0xff]
    %v185 = vld [vmem:[#allocation4 + $0x10] sm:$0xff]
    %v186 = vld [vmem:[#allocation4 + $0x18] sm:$0xff]
    %v187 = vld [vmem:[#allocation4 + $0x20] sm:$0xff]
    %v188 = vld [vmem:[#allocation4 + $0x28] sm:$0xff]
    %v189 = vld [vmem:[#allocation4 + $0x30] sm:$0xff]
    %v190 = vld [vmem:[#allocation4 + $0x38] sm:$0xff]
    %192 = vset.pattern.permute.xlu0 0
    %193 = vperm.xlu0 %192, %v183
    %v194 = vpop.permute.xlu0 %193
    %197 = vset.pattern.permute.xlu0 0
    %198 = vperm.xlu0 %197, %v184
    %v199 = vpop.permute.xlu0 %198
    %202 = vset.pattern.permute.xlu0 0
    %203 = vperm.xlu0 %202, %v185
    %v204 = vpop.permute.xlu0 %203
    %207 = vset.pattern.permute.xlu0 0
    %208 = vperm.xlu0 %207, %v186
    %v209 = vpop.permute.xlu0 %208
    %212 = vset.pattern.permute.xlu0 0
    %213 = vperm.xlu0 %212, %v187
    %v214 = vpop.permute.xlu0 %213
    %217 = vset.pattern.permute.xlu0 0
    %218 = vperm.xlu0 %217, %v188
    %v219 = vpop.permute.xlu0 %218
    %222 = vset.pattern.permute.xlu0 0
    %223 = vperm.xlu0 %222, %v189
    %v224 = vpop.permute.xlu0 %223
    %227 = vset.pattern.permute.xlu0 0
    %228 = vperm.xlu0 %227, %v190
    %v229 = vpop.permute.xlu0 %228
    %v231 = vadd.f32 %v151, %v194
    %v232 = vadd.f32 %v152, %v194
    %v233 = vadd.f32 %v153, %v194
    %v234 = vadd.f32 %v154, %v194
    %v235 = vadd.f32 %v155, %v199
    %v236 = vadd.f32 %v156, %v199
    %v237 = vadd.f32 %v157, %v199
    %v238 = vadd.f32 %v158, %v199
    %v239 = vadd.f32 %v159, %v204
    %v240 = vadd.f32 %v160, %v204
    %v241 = vadd.f32 %v161, %v204
    %v242 = vadd.f32 %v162, %v204
    %v243 = vadd.f32 %v163, %v209
    %v244 = vadd.f32 %v164, %v209
    %v245 = vadd.f32 %v165, %v209
    %v246 = vadd.f32 %v166, %v209
    %v247 = vadd.f32 %v167, %v214
    %v248 = vadd.f32 %v168, %v214
    %v249 = vadd.f32 %v169, %v214
    %v250 = vadd.f32 %v170, %v214
    %v251 = vadd.f32 %v171, %v219
    %v252 = vadd.f32 %v172, %v219
    %v253 = vadd.f32 %v173, %v219
    %v254 = vadd.f32 %v174, %v219
    %v255 = vadd.f32 %v175, %v224
    %v256 = vadd.f32 %v176, %v224
    %v257 = vadd.f32 %v177, %v224
    %v258 = vadd.f32 %v178, %v224
    %v259 = vadd.f32 %v179, %v229
    %v260 = vadd.f32 %v180, %v229
    %v261 = vadd.f32 %v181, %v229
    %v262 = vadd.f32 %v182, %v229
    %v263 = vmax.f32 %v231, 0.0
    %v264 = vmax.f32 %v232, 0.0
    %v265 = vmax.f32 %v233, 0.0
    %v266 = vmax.f32 %v234, 0.0
    %v267 = vmax.f32 %v235, 0.0
    %v268 = vmax.f32 %v236, 0.0
    %v269 = vmax.f32 %v237, 0.0
    %v270 = vmax.f32 %v238, 0.0
    %v271 = vmax.f32 %v239, 0.0
    %v272 = vmax.f32 %v240, 0.0
    %v273 = vmax.f32 %v241, 0.0
    %v274 = vmax.f32 %v242, 0.0
    %v275 = vmax.f32 %v243, 0.0
    %v276 = vmax.f32 %v244, 0.0
    %v277 = vmax.f32 %v245, 0.0
    %v278 = vmax.f32 %v246, 0.0
    %v279 = vmax.f32 %v247, 0.0
    %v280 = vmax.f32 %v248, 0.0
    %v281 = vmax.f32 %v249, 0.0
    %v282 = vmax.f32 %v250, 0.0
    %v283 = vmax.f32 %v251, 0.0
    %v284 = vmax.f32 %v252, 0.0
    %v285 = vmax.f32 %v253, 0.0
    %v286 = vmax.f32 %v254, 0.0
    %v287 = vmax.f32 %v255, 0.0
    %v288 = vmax.f32 %v256, 0.0
    %v289 = vmax.f32 %v257, 0.0
    %v290 = vmax.f32 %v258, 0.0
    %v291 = vmax.f32 %v259, 0.0
    %v292 = vmax.f32 %v260, 0.0
    %v293 = vmax.f32 %v261, 0.0
    %v294 = vmax.f32 %v262, 0.0
    %v295 = vld [vmem:[#allocation6] sm:$0xff]
    %v296 = vld [vmem:[#allocation6 + $0x8] sm:$0xff]
    %v297 = vld [vmem:[#allocation6 + $0x10] sm:$0xff]
    %v298 = vld [vmem:[#allocation6 + $0x18] sm:$0xff]
    %v299 = vld [vmem:[#allocation6 + $0x20] sm:$0xff]
    %v300 = vld [vmem:[#allocation6 + $0x28] sm:$0xff]
    %v301 = vld [vmem:[#allocation6 + $0x30] sm:$0xff]
    %v302 = vld [vmem:[#allocation6 + $0x38] sm:$0xff]
    %v303 = vld [vmem:[#allocation7] sm:$0xff]
    %v304 = vld [vmem:[#allocation7 + $0x8] sm:$0xff]
    %v305 = vld [vmem:[#allocation7 + $0x10] sm:$0xff]
    %v306 = vld [vmem:[#allocation7 + $0x18] sm:$0xff]
    %v307 = vld [vmem:[#allocation7 + $0x20] sm:$0xff]
    %v308 = vld [vmem:[#allocation7 + $0x28] sm:$0xff]
    %v309 = vld [vmem:[#allocation7 + $0x30] sm:$0xff]
    %v310 = vld [vmem:[#allocation7 + $0x38] sm:$0xff]
    %312 = vset.pattern.permute.xlu0 0
    %313 = vperm.xlu0 %312, %v303
    %v314 = vpop.permute.xlu0 %313
    %317 = vset.pattern.permute.xlu0 0
    %318 = vperm.xlu0 %317, %v304
    %v319 = vpop.permute.xlu0 %318
    %322 = vset.pattern.permute.xlu0 0
    %323 = vperm.xlu0 %322, %v305
    %v324 = vpop.permute.xlu0 %323
    %327 = vset.pattern.permute.xlu0 0
    %328 = vperm.xlu0 %327, %v306
    %v329 = vpop.permute.xlu0 %328
    %332 = vset.pattern.permute.xlu0 0
    %333 = vperm.xlu0 %332, %v307
    %v334 = vpop.permute.xlu0 %333
    %337 = vset.pattern.permute.xlu0 0
    %338 = vperm.xlu0 %337, %v308
    %v339 = vpop.permute.xlu0 %338
    %342 = vset.pattern.permute.xlu0 0
    %343 = vperm.xlu0 %342, %v309
    %v344 = vpop.permute.xlu0 %343
    %347 = vset.pattern.permute.xlu0 0
    %348 = vperm.xlu0 %347, %v310
    %v349 = vpop.permute.xlu0 %348
    %vm351 = vcmask 523264
    %v353 = vsel %vm351, %v295, 0
    %v356 = vsel %vm351, %v296, 0
    %v359 = vsel %vm351, %v297, 0
    %v362 = vsel %vm351, %v298, 0
    %v365 = vsel %vm351, %v299, 0
    %v368 = vsel %vm351, %v300, 0
    %v371 = vsel %vm351, %v301, 0
    %v374 = vsel %vm351, %v302, 0
    %376 = vmatprep.subr.mxu0 %v264
    %377 = vmatpush1.msra.mxu0 %v263
    %378 = vmatprep.subr.mxu0 %v268
    %379 = vmatpush1.msra.mxu0 %v267
    %380 = vmatprep.subr.mxu0 %v272
    %381 = vmatpush1.msra.mxu0 %v271
    %382 = vmatprep.subr.mxu0 %v276
    %383 = vmatpush1.msra.mxu0 %v275
    %384 = vmatprep.subr.mxu0 %v280
    %385 = vmatpush1.msra.mxu0 %v279
    %386 = vmatprep.subr.mxu0 %v284
    %387 = vmatpush1.msra.mxu0 %v283
    %388 = vmatprep.subr.mxu0 %v288
    %389 = vmatpush1.msra.mxu0 %v287
    %390 = vmatprep.subr.mxu0 %v292
    %391 = vmatpush1.msra.mxu0 %v291
    %392 = vmatprep.subr.mxu0 0.0
    %393 = vmatpush1.msra.mxu0 0.0
    %394 = vmatprep.subr.mxu0 0.0
    %395 = vmatpush1.msra.mxu0 0.0
    %396 = vmatprep.subr.mxu0 0.0
    %397 = vmatpush1.msra.mxu0 0.0
    %398 = vmatprep.subr.mxu0 0.0
    %399 = vmatpush1.msra.mxu0 0.0
    %400 = vmatprep.subr.mxu0 0.0
    %401 = vmatpush1.msra.mxu0 0.0
    %402 = vmatprep.subr.mxu0 0.0
    %403 = vmatpush1.msra.mxu0 0.0
    %404 = vmatprep.subr.mxu0 0.0
    %405 = vmatpush1.msra.mxu0 0.0
    %406 = vmatprep.subr.mxu0 0.0
    %407 = vmatpush1.msra.mxu0 0.0
    %408 = vmatprep.subr.mxu0 0.0
    %409 = vmatpush1.msra.mxu0 0.0
    %410 = vmatprep.subr.mxu0 0.0
    %411 = vmatpush1.msra.mxu0 0.0
    %412 = vmatprep.subr.mxu0 0.0
    %413 = vmatpush1.msra.mxu0 0.0
    %414 = vmatprep.subr.mxu0 0.0
    %415 = vmatpush1.msra.mxu0 0.0
    %416 = vmatprep.subr.mxu0 0.0
    %417 = vmatpush1.msra.mxu0 0.0
    %418 = vmatprep.subr.mxu0 0.0
    %419 = vmatpush1.msra.mxu0 0.0
    %420 = vmatprep.subr.mxu0 0.0
    %421 = vmatpush1.msra.mxu0 0.0
    %422 = vmatprep.subr.mxu0 0.0
    %423 = vmatpush1.msra.mxu0 0.0
    %424 = vmatprep.subr.mxu0 0.0
    %425 = vmatpush1.msra.mxu0 0.0
    %426 = vmatprep.subr.mxu0 0.0
    %427 = vmatpush1.msra.mxu0 0.0
    %428 = vmatprep.subr.mxu0 0.0
    %429 = vmatpush1.msra.mxu0 0.0
    %430 = vmatprep.subr.mxu0 0.0
    %431 = vmatpush1.msra.mxu0 0.0
    %432 = vmatprep.subr.mxu0 0.0
    %433 = vmatpush1.msra.mxu0 0.0
    %434 = vmatprep.subr.mxu0 0.0
    %435 = vmatpush1.msra.mxu0 0.0
    %436 = vmatprep.subr.mxu0 0.0
    %437 = vmatpush1.msra.mxu0 0.0
    %438 = vmatprep.subr.mxu0 0.0
    %439 = vmatpush1.msra.mxu0 0.0
    %440 = vmatprep.mubr.f32.mxu0 0.0
    %441 = vmatmul.mubr.f32.gmra.mrb[0].mxu0 %v353
    %v442 = vpop.f32.mrb[0].mxu0
    %v443 = vadd.f32 %v314, %v442
    %v444 = vpop.f32.mrb[0].mxu0
    %v445 = vadd.f32 %v314, %v444
    %446 = vmatprep.mubr.f32.mxu0 0.0
    %447 = vmatmul.mubr.f32.gmra.mrb[0].mxu0 %v356
    %v448 = vpop.f32.mrb[0].mxu0
    %v449 = vadd.f32 %v319, %v448
    %v450 = vpop.f32.mrb[0].mxu0
    %v451 = vadd.f32 %v319, %v450
    %452 = vmatprep.mubr.f32.mxu0 0.0
    %453 = vmatmul.mubr.f32.gmra.mrb[0].mxu0 %v359
    %v454 = vpop.f32.mrb[0].mxu0
    %v455 = vadd.f32 %v324, %v454
    %v456 = vpop.f32.mrb[0].mxu0
    %v457 = vadd.f32 %v324, %v456
    %458 = vmatprep.mubr.f32.mxu0 0.0
    %459 = vmatmul.mubr.f32.gmra.mrb[0].mxu0 %v362
    %v460 = vpop.f32.mrb[0].mxu0
    %v461 = vadd.f32 %v329, %v460
    %v462 = vpop.f32.mrb[0].mxu0
    %v463 = vadd.f32 %v329, %v462
    %464 = vmatprep.mubr.f32.mxu0 0.0
    %465 = vmatmul.mubr.f32.gmra.mrb[0].mxu0 %v365
    %v466 = vpop.f32.mrb[0].mxu0
    %v467 = vadd.f32 %v334, %v466
    %v468 = vpop.f32.mrb[0].mxu0
    %v469 = vadd.f32 %v334, %v468
    %470 = vmatprep.mubr.f32.mxu0 0.0
    %471 = vmatmul.mubr.f32.gmra.mrb[0].mxu0 %v368
    %v472 = vpop.f32.mrb[0].mxu0
    %v473 = vadd.f32 %v339, %v472
    %v474 = vpop.f32.mrb[0].mxu0
    %v475 = vadd.f32 %v339, %v474
    %476 = vmatprep.mubr.f32.mxu0 0.0
    %477 = vmatmul.mubr.f32.gmra.mrb[0].mxu0 %v371
    %v478 = vpop.f32.mrb[0].mxu0
    %v479 = vadd.f32 %v344, %v478
    %v480 = vpop.f32.mrb[0].mxu0
    %v481 = vadd.f32 %v344, %v480
    %482 = vmatprep.mubr.f32.mxu0 0.0
    %483 = vmatmul.mubr.f32.gmra.mrb[0].mxu0 %v374
    %v484 = vpop.f32.mrb[0].mxu0
    %v485 = vadd.f32 %v349, %v484
    %v486 = vpop.f32.mrb[0].mxu0
    %v487 = vadd.f32 %v349, %v486
    %488 = vdwg.mxu0
    %489 = vmatprep.subr.mxu0 %v266
    %490 = vmatpush1.msra.mxu0 %v265
    %491 = vmatprep.subr.mxu0 %v270
    %492 = vmatpush1.msra.mxu0 %v269
    %493 = vmatprep.subr.mxu0 %v274
    %494 = vmatpush1.msra.mxu0 %v273
    %495 = vmatprep.subr.mxu0 %v278
    %496 = vmatpush1.msra.mxu0 %v277
    %497 = vmatprep.subr.mxu0 %v282
    %498 = vmatpush1.msra.mxu0 %v281
    %499 = vmatprep.subr.mxu0 %v286
    %500 = vmatpush1.msra.mxu0 %v285
    %501 = vmatprep.subr.mxu0 %v290
    %502 = vmatpush1.msra.mxu0 %v289
    %503 = vmatprep.subr.mxu0 %v294
    %504 = vmatpush1.msra.mxu0 %v293
    %505 = vmatprep.subr.mxu0 0.0
    %506 = vmatpush1.msra.mxu0 0.0
    %507 = vmatprep.subr.mxu0 0.0
    %508 = vmatpush1.msra.mxu0 0.0
    %509 = vmatprep.subr.mxu0 0.0
    %510 = vmatpush1.msra.mxu0 0.0
    %511 = vmatprep.subr.mxu0 0.0
    %512 = vmatpush1.msra.mxu0 0.0
    %513 = vmatprep.subr.mxu0 0.0
    %514 = vmatpush1.msra.mxu0 0.0
    %515 = vmatprep.subr.mxu0 0.0
    %516 = vmatpush1.msra.mxu0 0.0
    %517 = vmatprep.subr.mxu0 0.0
    %518 = vmatpush1.msra.mxu0 0.0
    %519 = vmatprep.subr.mxu0 0.0
    %520 = vmatpush1.msra.mxu0 0.0
    %521 = vmatprep.subr.mxu0 0.0
    %522 = vmatpush1.msra.mxu0 0.0
    %523 = vmatprep.subr.mxu0 0.0
    %524 = vmatpush1.msra.mxu0 0.0
    %525 = vmatprep.subr.mxu0 0.0
    %526 = vmatpush1.msra.mxu0 0.0
    %527 = vmatprep.subr.mxu0 0.0
    %528 = vmatpush1.msra.mxu0 0.0
    %529 = vmatprep.subr.mxu0 0.0
    %530 = vmatpush1.msra.mxu0 0.0
    %531 = vmatprep.subr.mxu0 0.0
    %532 = vmatpush1.msra.mxu0 0.0
    %533 = vmatprep.subr.mxu0 0.0
    %534 = vmatpush1.msra.mxu0 0.0
    %535 = vmatprep.subr.mxu0 0.0
    %536 = vmatpush1.msra.mxu0 0.0
    %537 = vmatprep.subr.mxu0 0.0
    %538 = vmatpush1.msra.mxu0 0.0
    %539 = vmatprep.subr.mxu0 0.0
    %540 = vmatpush1.msra.mxu0 0.0
    %541 = vmatprep.subr.mxu0 0.0
    %542 = vmatpush1.msra.mxu0 0.0
    %543 = vmatprep.subr.mxu0 0.0
    %544 = vmatpush1.msra.mxu0 0.0
    %545 = vmatprep.subr.mxu0 0.0
    %546 = vmatpush1.msra.mxu0 0.0
    %547 = vmatprep.subr.mxu0 0.0
    %548 = vmatpush1.msra.mxu0 0.0
    %549 = vmatprep.subr.mxu0 0.0
    %550 = vmatpush1.msra.mxu0 0.0
    %551 = vmatprep.subr.mxu0 0.0
    %552 = vmatpush1.msra.mxu0 0.0
    %553 = vmatprep.mubr.f32.mxu0 0.0
    %554 = vmatmul.mubr.f32.gmra.mrb[0].mxu0 %v353
    %v555 = vpop.f32.mrb[0].mxu0
    %v556 = vadd.f32 %v314, %v555
    %v557 = vpop.f32.mrb[0].mxu0
    %v558 = vadd.f32 %v314, %v557
    %559 = vmatprep.mubr.f32.mxu0 0.0
    %560 = vmatmul.mubr.f32.gmra.mrb[0].mxu0 %v356
    %v561 = vpop.f32.mrb[0].mxu0
    %v562 = vadd.f32 %v319, %v561
    %v563 = vpop.f32.mrb[0].mxu0
    %v564 = vadd.f32 %v319, %v563
    %565 = vmatprep.mubr.f32.mxu0 0.0
    %566 = vmatmul.mubr.f32.gmra.mrb[0].mxu0 %v359
    %v567 = vpop.f32.mrb[0].mxu0
    %v568 = vadd.f32 %v324, %v567
    %v569 = vpop.f32.mrb[0].mxu0
    %v570 = vadd.f32 %v324, %v569
    %571 = vmatprep.mubr.f32.mxu0 0.0
    %572 = vmatmul.mubr.f32.gmra.mrb[0].mxu0 %v362
    %v573 = vpop.f32.mrb[0].mxu0
    %v574 = vadd.f32 %v329, %v573
    %v575 = vpop.f32.mrb[0].mxu0
    %v576 = vadd.f32 %v329, %v575
    %577 = vmatprep.mubr.f32.mxu0 0.0
    %578 = vmatmul.mubr.f32.gmra.mrb[0].mxu0 %v365
    %v579 = vpop.f32.mrb[0].mxu0
    %v580 = vadd.f32 %v334, %v579
    %v581 = vpop.f32.mrb[0].mxu0
    %v582 = vadd.f32 %v334, %v581
    %583 = vmatprep.mubr.f32.mxu0 0.0
    %584 = vmatmul.mubr.f32.gmra.mrb[0].mxu0 %v368
    %v585 = vpop.f32.mrb[0].mxu0
    %v586 = vadd.f32 %v339, %v585
    %v587 = vpop.f32.mrb[0].mxu0
    %v588 = vadd.f32 %v339, %v587
    %589 = vmatprep.mubr.f32.mxu0 0.0
    %590 = vmatmul.mubr.f32.gmra.mrb[0].mxu0 %v371
    %v591 = vpop.f32.mrb[0].mxu0
    %v592 = vadd.f32 %v344, %v591
    %v593 = vpop.f32.mrb[0].mxu0
    %v594 = vadd.f32 %v344, %v593
    %595 = vmatprep.mubr.f32.mxu0 0.0
    %596 = vmatmul.mubr.f32.gmra.mrb[0].mxu0 %v374
    %v597 = vpop.f32.mrb[0].mxu0
    %v598 = vadd.f32 %v349, %v597
    %v599 = vpop.f32.mrb[0].mxu0
    %v600 = vadd.f32 %v349, %v599
    %601 = vdwg.mxu0
    %v602 = vmax.f32 %v443, 0.0
    %v603 = vmax.f32 %v445, 0.0
    %v604 = vmax.f32 %v556, 0.0
    %v605 = vmax.f32 %v558, 0.0
    %v606 = vmax.f32 %v449, 0.0
    %v607 = vmax.f32 %v451, 0.0
    %v608 = vmax.f32 %v562, 0.0
    %v609 = vmax.f32 %v564, 0.0
    %v610 = vmax.f32 %v455, 0.0
    %v611 = vmax.f32 %v457, 0.0
    %v612 = vmax.f32 %v568, 0.0
    %v613 = vmax.f32 %v570, 0.0
    %v614 = vmax.f32 %v461, 0.0
    %v615 = vmax.f32 %v463, 0.0
    %v616 = vmax.f32 %v574, 0.0
    %v617 = vmax.f32 %v576, 0.0
    %v618 = vmax.f32 %v467, 0.0
    %v619 = vmax.f32 %v469, 0.0
    %v620 = vmax.f32 %v580, 0.0
    %v621 = vmax.f32 %v582, 0.0
    %v622 = vmax.f32 %v473, 0.0
    %v623 = vmax.f32 %v475, 0.0
    %v624 = vmax.f32 %v586, 0.0
    %v625 = vmax.f32 %v588, 0.0
    %v626 = vmax.f32 %v479, 0.0
    %v627 = vmax.f32 %v481, 0.0
    %v628 = vmax.f32 %v592, 0.0
    %v629 = vmax.f32 %v594, 0.0
    %v630 = vmax.f32 %v485, 0.0
    %v631 = vmax.f32 %v487, 0.0
    %v632 = vmax.f32 %v598, 0.0
    %v633 = vmax.f32 %v600, 0.0
    %v634 = vld [vmem:[%s5] sm:$0xff]
    %v635 = vld [vmem:[%s6] sm:$0xff]
    %637 = vset.pattern.permute.xlu0 0
    %638 = vperm.xlu0 %637, %v635
    %v639 = vpop.permute.xlu0 %638
    %v642 = vsel %vm351, %v634, 0
    %644 = vmatprep.subr.mxu0 %v603
    %645 = vmatpush1.msra.mxu0 %v602
    %646 = vmatprep.subr.mxu0 %v607
    %647 = vmatpush1.msra.mxu0 %v606
    %648 = vmatprep.subr.mxu0 %v611
    %649 = vmatpush1.msra.mxu0 %v610
    %650 = vmatprep.subr.mxu0 %v615
    %651 = vmatpush1.msra.mxu0 %v614
    %652 = vmatprep.subr.mxu0 %v619
    %653 = vmatpush1.msra.mxu0 %v618
    %654 = vmatprep.subr.mxu0 %v623
    %655 = vmatpush1.msra.mxu0 %v622
    %656 = vmatprep.subr.mxu0 %v627
    %657 = vmatpush1.msra.mxu0 %v626
    %658 = vmatprep.subr.mxu0 %v631
    %659 = vmatpush1.msra.mxu0 %v630
    %660 = vmatprep.subr.mxu0 0.0
    %661 = vmatpush1.msra.mxu0 0.0
    %662 = vmatprep.subr.mxu0 0.0
    %663 = vmatpush1.msra.mxu0 0.0
    %664 = vmatprep.subr.mxu0 0.0
    %665 = vmatpush1.msra.mxu0 0.0
    %666 = vmatprep.subr.mxu0 0.0
    %667 = vmatpush1.msra.mxu0 0.0
    %668 = vmatprep.subr.mxu0 0.0
    %669 = vmatpush1.msra.mxu0 0.0
    %670 = vmatprep.subr.mxu0 0.0
    %671 = vmatpush1.msra.mxu0 0.0
    %672 = vmatprep.subr.mxu0 0.0
    %673 = vmatpush1.msra.mxu0 0.0
    %674 = vmatprep.subr.mxu0 0.0
    %675 = vmatpush1.msra.mxu0 0.0
    %676 = vmatprep.subr.mxu0 0.0
    %677 = vmatpush1.msra.mxu0 0.0
    %678 = vmatprep.subr.mxu0 0.0
    %679 = vmatpush1.msra.mxu0 0.0
    %680 = vmatprep.subr.mxu0 0.0
    %681 = vmatpush1.msra.mxu0 0.0
    %682 = vmatprep.subr.mxu0 0.0
    %683 = vmatpush1.msra.mxu0 0.0
    %684 = vmatprep.subr.mxu0 0.0
    %685 = vmatpush1.msra.mxu0 0.0
    %686 = vmatprep.subr.mxu0 0.0
    %687 = vmatpush1.msra.mxu0 0.0
    %688 = vmatprep.subr.mxu0 0.0
    %689 = vmatpush1.msra.mxu0 0.0
    %690 = vmatprep.subr.mxu0 0.0
    %691 = vmatpush1.msra.mxu0 0.0
    %692 = vmatprep.subr.mxu0 0.0
    %693 = vmatpush1.msra.mxu0 0.0
    %694 = vmatprep.subr.mxu0 0.0
    %695 = vmatpush1.msra.mxu0 0.0
    %696 = vmatprep.subr.mxu0 0.0
    %697 = vmatpush1.msra.mxu0 0.0
    %698 = vmatprep.subr.mxu0 0.0
    %699 = vmatpush1.msra.mxu0 0.0
    %700 = vmatprep.subr.mxu0 0.0
    %701 = vmatpush1.msra.mxu0 0.0
    %702 = vmatprep.subr.mxu0 0.0
    %703 = vmatpush1.msra.mxu0 0.0
    %704 = vmatprep.subr.mxu0 0.0
    %705 = vmatpush1.msra.mxu0 0.0
    %706 = vmatprep.subr.mxu0 0.0
    %707 = vmatpush1.msra.mxu0 0.0
    %708 = vmatprep.mubr.f32.mxu0 0.0
    %709 = vmatmul.mubr.f32.gmra.mrb[0].mxu0 %v642
    %v710 = vpop.f32.mrb[0].mxu0
    %v711 = vadd.f32 %v639, %v710
    %v712 = vpop.f32.mrb[0].mxu0
    %v713 = vadd.f32 %v639, %v712
    %714 = vdwg.mxu0
    %715 = vmatprep.subr.mxu0 %v605
    %716 = vmatpush1.msra.mxu0 %v604
    %717 = vmatprep.subr.mxu0 %v609
    %718 = vmatpush1.msra.mxu0 %v608
    %719 = vmatprep.subr.mxu0 %v613
    %720 = vmatpush1.msra.mxu0 %v612
    %721 = vmatprep.subr.mxu0 %v617
    %722 = vmatpush1.msra.mxu0 %v616
    %723 = vmatprep.subr.mxu0 %v621
    %724 = vmatpush1.msra.mxu0 %v620
    %725 = vmatprep.subr.mxu0 %v625
    %726 = vmatpush1.msra.mxu0 %v624
    %727 = vmatprep.subr.mxu0 %v629
    %728 = vmatpush1.msra.mxu0 %v628
    %729 = vmatprep.subr.mxu0 %v633
    %730 = vmatpush1.msra.mxu0 %v632
    %731 = vmatprep.subr.mxu0 0.0
    %732 = vmatpush1.msra.mxu0 0.0
    %733 = vmatprep.subr.mxu0 0.0
    %734 = vmatpush1.msra.mxu0 0.0
    %735 = vmatprep.subr.mxu0 0.0
    %736 = vmatpush1.msra.mxu0 0.0
    %737 = vmatprep.subr.mxu0 0.0
    %738 = vmatpush1.msra.mxu0 0.0
    %739 = vmatprep.subr.mxu0 0.0
    %740 = vmatpush1.msra.mxu0 0.0
    %741 = vmatprep.subr.mxu0 0.0
    %742 = vmatpush1.msra.mxu0 0.0
    %743 = vmatprep.subr.mxu0 0.0
    %744 = vmatpush1.msra.mxu0 0.0
    %745 = vmatprep.subr.mxu0 0.0
    %746 = vmatpush1.msra.mxu0 0.0
    %747 = vmatprep.subr.mxu0 0.0
    %748 = vmatpush1.msra.mxu0 0.0
    %749 = vmatprep.subr.mxu0 0.0
    %750 = vmatpush1.msra.mxu0 0.0
    %751 = vmatprep.subr.mxu0 0.0
    %752 = vmatpush1.msra.mxu0 0.0
    %753 = vmatprep.subr.mxu0 0.0
    %754 = vmatpush1.msra.mxu0 0.0
    %755 = vmatprep.subr.mxu0 0.0
    %756 = vmatpush1.msra.mxu0 0.0
    %757 = vmatprep.subr.mxu0 0.0
    %758 = vmatpush1.msra.mxu0 0.0
    %759 = vmatprep.subr.mxu0 0.0
    %760 = vmatpush1.msra.mxu0 0.0
    %761 = vmatprep.subr.mxu0 0.0
    %762 = vmatpush1.msra.mxu0 0.0
    %763 = vmatprep.subr.mxu0 0.0
    %764 = vmatpush1.msra.mxu0 0.0
    %765 = vmatprep.subr.mxu0 0.0
    %766 = vmatpush1.msra.mxu0 0.0
    %767 = vmatprep.subr.mxu0 0.0
    %768 = vmatpush1.msra.mxu0 0.0
    %769 = vmatprep.subr.mxu0 0.0
    %770 = vmatpush1.msra.mxu0 0.0
    %771 = vmatprep.subr.mxu0 0.0
    %772 = vmatpush1.msra.mxu0 0.0
    %773 = vmatprep.subr.mxu0 0.0
    %774 = vmatpush1.msra.mxu0 0.0
    %775 = vmatprep.subr.mxu0 0.0
    %776 = vmatpush1.msra.mxu0 0.0
    %777 = vmatprep.subr.mxu0 0.0
    %778 = vmatpush1.msra.mxu0 0.0
    %779 = vmatprep.mubr.f32.mxu0 0.0
    %780 = vmatmul.mubr.f32.gmra.mrb[0].mxu0 %v642
    %v781 = vpop.f32.mrb[0].mxu0
    %v782 = vadd.f32 %v639, %v781
    %v783 = vpop.f32.mrb[0].mxu0
    %v784 = vadd.f32 %v639, %v783
    %785 = vdwg.mxu0
    %786 = vst [vmem:[%s7] sm:$0xff] %v711
    %787 = vst [vmem:[%s7 + $0x8] sm:$0xff] %v713
    %788 = vst [vmem:[%s7 + $0x10] sm:$0xff] %v782
    %789 = vst [vmem:[%s7 + $0x18] sm:$0xff] %v784
    // Predicated region
    $region46: #{uncertainty_model_forward.1} parent=1 // pred_check
      _
    $region47: #{uncertainty_model_forward.1} parent=1 // pred_check_branch
      %791 = sbr.rel (0) target = $region49
    $region48: #{uncertainty_model_forward.1} parent=1 // pred_region
      _
    $region49: #{uncertainty_model_forward.1} parent=1 // pred_fallthru
      _
    // Predicated region
    $region50: #{uncertainty_model_forward.1} parent=1 // pred_check
      _
    $region51: #{uncertainty_model_forward.1} parent=1 // pred_check_branch
      %793 = sbr.rel (0) target = $region53
    $region52: #{uncertainty_model_forward.1} parent=1 // pred_region
      _
    $region53: #{uncertainty_model_forward.1} parent=1 // pred_fallthru
      _
    %794 = vsyncpa [#allocation3], 1
    %795 = vsyncpa [#allocation5], 1
    %796 = vsyncpa [#allocation8], 1

</llo_original>
